<compile_context>
chip_gen: v6e
topology: v6e:2x2x1
jax: 0.10.0
libtpu: 0.0.40
codegen_flags: <defaults>
</compile_context>

<pallas_src>
import functools

import jax
import jax.numpy as jnp
from jax.experimental import pallas as pl
from jax.experimental.pallas import tpu as pltpu

INPUT_DIM = 28 * 28   # 784
OUTPUT_DIM = 10


def _round_up(n, m):
    return ((n + m - 1) // m) * m


def linear_kernel(x_ref, w_ref, b_ref, o_ref):
    # x_ref: (tb, 784) f32  -- streamed per grid step (double-buffered DMA)
    # w_ref: (784, 10) bf16 -- constant index_map => stays VMEM-resident
    # b_ref: (1, 10)   f32  -- broadcast add on the VPU
    # o_ref: (tb, 10)  f32  -- narrow but contiguous-in-HBM writeback
    x_bf16 = x_ref[...].astype(jnp.bfloat16)          # VPU cast, hidden under x DMA
    acc = jnp.dot(x_bf16, w_ref[...], preferred_element_type=jnp.float32)
    o_ref[...] = acc + b_ref[...]


def prepare_params(weight, bias):
    """One-time parameter repacking; do NOT call per forward pass.

    weight: (10, 784) f32 (PyTorch nn.Linear layout), bias: (10,) f32
    -> w_bf16: (784, 10) bf16, b_row: (1, 10) f32
    """
    w_bf16 = weight.T.astype(jnp.bfloat16)                     # (784, 10)
    b_row = bias.reshape(1, OUTPUT_DIM).astype(jnp.float32)    # (1, 10)
    return w_bf16, b_row


def _pallas_impl(x, w_bf16, b_row, block_b):
    B = x.shape[0]
    # Batch tile: multiple of 8 sublanes; capped at ceil(B/2) so the grid has
    # at least 2 parallel steps whenever possible (keeps v7x's 2nd TC busy).
    tb = min(block_b, max(8, _round_up(pl.cdiv(B, 2), 8)))
    grid = (pl.cdiv(B, tb),)   # ragged last block is clipped by Pallas

    cost = pl.CostEstimate(
        flops=2 * B * INPUT_DIM * OUTPUT_DIM,
        transcendentals=0,
        bytes_accessed=(B * INPUT_DIM * 4           # x (f32 read)
                        + INPUT_DIM * OUTPUT_DIM * 2  # weight (bf16)
                        + OUTPUT_DIM * 4              # bias
                        + B * OUTPUT_DIM * 4),        # output (f32 write)
    )

    return pl.pallas_call(
        linear_kernel,
        out_shape=jax.ShapeDtypeStruct((B, OUTPUT_DIM), jnp.float32),
        grid_spec=pltpu.PrefetchScalarGridSpec(
            num_scalar_prefetch=0,
            grid=grid,
            in_specs=[
                pl.BlockSpec((tb, INPUT_DIM), lambda i: (i, 0)),         # x tiles
                # NOTE: constant index_map => weight/bias stay resident; could
                # also be marked pipeline_mode=pl.Buffered(1) to save ~200 KiB
                # of pointless double-buffer VMEM (only matters at huge tb).
                pl.BlockSpec((INPUT_DIM, OUTPUT_DIM), lambda i: (0, 0)),  # weight
                pl.BlockSpec((1, OUTPUT_DIM), lambda i: (0, 0)),          # bias
            ],
            out_specs=pl.BlockSpec((tb, OUTPUT_DIM), lambda i: (i, 0)),
        ),
        compiler_params=pltpu.CompilerParams(
            dimension_semantics=("parallel",),       # batch tiles are independent
            vmem_limit_bytes=32 * 1024 * 1024,       # tb=2048 f32 fits on v5e too
        ),
        cost_estimate=cost,
    )(x, w_bf16, b_row)


@functools.partial(jax.jit, static_argnames=("block_b", "min_pallas_batch"))
def logistic_reg_forward(x, w_bf16, b_row, block_b=2048, min_pallas_batch=512):
    """x: (B, 784) f32; w_bf16/b_row from prepare_params. Returns (B, 10) f32."""
    if x.shape[0] < min_pallas_batch:
        # Latency-bound regime: a single fused XLA matmul beats the custom call.
        return jnp.dot(x.astype(jnp.bfloat16), w_bf16,
                       preferred_element_type=jnp.float32) + b_row
    return _pallas_impl(x, w_bf16, b_row, block_b)


def init_params(key):
    # Matches nn.Linear default init: U(-1/sqrt(in), 1/sqrt(in))
    kw, kb = jax.random.split(key)
    bound = 1.0 / jnp.sqrt(jnp.float32(INPUT_DIM))
    weight = jax.random.uniform(kw, (OUTPUT_DIM, INPUT_DIM),
                                minval=-bound, maxval=bound, dtype=jnp.float32)
    bias = jax.random.uniform(kb, (OUTPUT_DIM,),
                              minval=-bound, maxval=bound, dtype=jnp.float32)
    return weight, bias


if __name__ == "__main__":
    key = jax.random.PRNGKey(0)
    k_x, k_p = jax.random.split(key)

    weight, bias = init_params(k_p)
    # One-time repacking of the parameters (outside the per-call path).
    w_bf16, b_row = prepare_params(weight, bias)

    # Exercise the Pallas path (min_pallas_batch=0 forces the kernel) at small
    # shapes, including B=19 to hit the ragged last block of the cdiv grid.
    for B in (8, 19):
        x = jax.random.normal(jax.random.fold_in(k_x, B), (B, INPUT_DIM),
                              dtype=jnp.float32)
        out = logistic_reg_forward(x, w_bf16, b_row, min_pallas_batch=0)
        out = jax.block_until_ready(out)
        assert out.shape == (B, OUTPUT_DIM)

        # Reference at matching precision (bf16 inputs/weights, f32 accumulation).
        ref_bf16 = (x.astype(jnp.bfloat16).astype(jnp.float32)
                    @ weight.T.astype(jnp.bfloat16).astype(jnp.float32)
                    + bias)
        assert jnp.allclose(out, ref_bf16, atol=2e-3, rtol=2e-3), (
            f"mismatch vs bf16 reference at B={B}")

        # Sanity check against the full-f32 torch-equivalent math (looser tol:
        # inputs/weights are rounded to bf16 before the MXU).
        ref_f32 = x @ weight.T + bias
        assert jnp.allclose(out, ref_f32, atol=5e-2, rtol=5e-2), (
            f"mismatch vs f32 reference at B={B}")

    # Dispatcher sanity: small-B default path (plain XLA) agrees with the kernel.
    x = jax.random.normal(jax.random.fold_in(k_x, 8), (8, INPUT_DIM),
                          dtype=jnp.float32)
    out_xla = jax.block_until_ready(logistic_reg_forward(x, w_bf16, b_row))
    out_pl = jax.block_until_ready(
        logistic_reg_forward(x, w_bf16, b_row, min_pallas_batch=0))
    assert jnp.allclose(out_xla, out_pl, atol=2e-3, rtol=2e-3)

    print("KERNEL_OK")
</pallas_src>

<mosaic_0001>
module attributes {stable_mosaic.version = 11 : i64} {
  func.func @linear_kernel(%arg0: i32, %arg1: memref<8x784xf32, #tpu.memory_space<vmem>>, %arg2: memref<784x10xbf16, #tpu.memory_space<vmem>>, %arg3: memref<1x10xf32, #tpu.memory_space<vmem>>, %arg4: memref<8x10xf32, #tpu.memory_space<vmem>>) attributes {dimension_semantics = [#tpu.dimension_semantics<parallel>], iteration_bounds = array<i64: 1>, scalar_prefetch = 0 : i64, scratch_operands = 0 : i64, tpu.core_type = #tpu.core_type<tc>, window_params = [{transform_indices = @transform_0, window_bounds = array<i64: 8, 784>}, {pipeline_mode = #tpu.pipeline_mode<synchronous>, transform_indices = @transform_1, window_bounds = array<i64: 784, 10>}, {pipeline_mode = #tpu.pipeline_mode<synchronous>, transform_indices = @transform_2, window_bounds = array<i64: 1, 10>}, {transform_indices = @transform_3, window_bounds = array<i64: 8, 10>}]} {
    %c0 = arith.constant 0 : index
    %c0_0 = arith.constant 0 : index
    %0 = vector.load %arg1[%c0, %c0_0] : memref<8x784xf32, #tpu.memory_space<vmem>>, vector<8x784xf32>
    %1 = arith.truncf %0 : vector<8x784xf32> to vector<8x784xbf16>
    %c0_1 = arith.constant 0 : index
    %c0_2 = arith.constant 0 : index
    %2 = vector.load %arg2[%c0_1, %c0_2] : memref<784x10xbf16, #tpu.memory_space<vmem>>, vector<784x10xbf16>
    %cst = arith.constant dense<0.000000e+00> : vector<8x10xf32>
    %3 = tpu.matmul %1, %2, %cst {dimension_numbers = #tpu.dot_dimension_numbers<[1], [0], [0], [1], [0, 0, 1, 1], [], []>} : vector<8x784xbf16>, vector<784x10xbf16>, vector<8x10xf32> -> vector<8x10xf32>
    %c0_3 = arith.constant 0 : index
    %c0_4 = arith.constant 0 : index
    %4 = vector.load %arg3[%c0_3, %c0_4] : memref<1x10xf32, #tpu.memory_space<vmem>>, vector<1x10xf32>
    %5 = vector.broadcast %4 : vector<1x10xf32> to vector<8x10xf32>
    %6 = arith.addf %3, %5 : vector<8x10xf32>
    %c0_5 = arith.constant 0 : index
    %c0_6 = arith.constant 0 : index
    %7 = vector.load %arg4[%c0_5, %c0_6] : memref<8x10xf32, #tpu.memory_space<vmem>>, vector<8x10xf32>
    tpu.vector_store %arg4[%c0_5, %c0_6], %6 {strides = array<i32>} : memref<8x10xf32, #tpu.memory_space<vmem>>, vector<8x10xf32>,
    return
  }
  func.func @transform_0(%arg0: i32) -> (i32, i32) {
    %c0_i32 = arith.constant 0 : i32
    %c0_i32_0 = arith.constant 0 : i32
    return %arg0, %c0_i32 : i32, i32
  }
  func.func @transform_1(%arg0: i32) -> (i32, i32) {
    %c0_i32 = arith.constant 0 : i32
    %c0_i32_0 = arith.constant 0 : i32
    %c0_i32_1 = arith.constant 0 : i32
    return %c0_i32, %c0_i32_0 : i32, i32
  }
  func.func @transform_2(%arg0: i32) -> (i32, i32) {
    %c0_i32 = arith.constant 0 : i32
    %c0_i32_0 = arith.constant 0 : i32
    %c0_i32_1 = arith.constant 0 : i32
    return %c0_i32, %c0_i32_0 : i32, i32
  }
  func.func @transform_3(%arg0: i32) -> (i32, i32) {
    %c0_i32 = arith.constant 0 : i32
    %c0_i32_0 = arith.constant 0 : i32
    return %arg0, %c0_i32 : i32, i32
  }
}

</mosaic_0001>

<llo_original>
// kernel: logistic_reg_forward.1
$region0: #{logistic_reg_forward.1}
  #allocation0 [shape = 'u32[]', space=smem, size = 0x4, offset = 0x4, fixed_abs, tag = 'smem constant byte address 0x4 - core index']
  #allocation1 [shape = 'u32[144,128]{1,0:T(1,128)}', space=vmem, size = 0x12000, scoped, tag = 'internal scratch']
  %s0 = inlined_call_operand.vmem [shape: f32[8,784], index: 0, kind: input, shape index: {}]
  %s1 = inlined_call_operand.vmem [shape: bf16[784,10], index: 1, kind: input, shape index: {}]
  %s2 = inlined_call_operand.vmem [shape: f32[1,10], index: 2, kind: input, shape index: {}]
  %s3 = inlined_call_operand.hbm [shape: f32[8,10], index: 3, kind: output, shape index: {}]
  %s4 = sld [smem:[#allocation0]]
  $region22: #{logistic_reg_forward.1} parent=0
    _
  %s6 = ssub.s32 1, %s4
  %s7 = scalar_select 0, %s6, %s4
  $region1: #{logistic_reg_forward.1} parent=0
    #allocation2 [shape = 'u8[4096]{0}', space=vmem, size = 0x1000, scoped, tag = 'output window, operand 0, single buffered']
    #allocation3 [shape = 's32[1]{0}', space=sflag, size = 0x4, scoped, tag = 'scoped memory for logistic_reg_forward.1']
    %8 = vsyncpa [#allocation3], 0
    // Predicated region
    $region2: #{logistic_reg_forward.1} parent=1 // pred_check
      _
    $region3: #{logistic_reg_forward.1} parent=1 // pred_check_branch
      %10 = sbr.rel (0) target = $region5
    $region4: #{logistic_reg_forward.1} parent=1 // pred_region
      _
    $region5: #{logistic_reg_forward.1} parent=1 // pred_fallthru
      _
    // Predicated region
    $region6: #{logistic_reg_forward.1} parent=1 // pred_check
      _
    $region7: #{logistic_reg_forward.1} parent=1 // pred_check_branch
      %12 = sbr.rel (0) target = $region9
    $region8: #{logistic_reg_forward.1} parent=1 // pred_region
      _
    $region9: #{logistic_reg_forward.1} parent=1 // pred_fallthru
      _
    // Predicated region
    $region10: #{logistic_reg_forward.1} parent=1 // pred_check
      _
    $region11: #{logistic_reg_forward.1} parent=1 // pred_check_branch
      %14 = sbr.rel (0) target = $region13
    $region12: #{logistic_reg_forward.1} parent=1 // pred_region
      _
    $region13: #{logistic_reg_forward.1} parent=1 // pred_fallthru
      _
    %v16 = vld [vmem:[%s0] sm:$0xff]
    %v17 = vld [vmem:[%s0 + $0x8] sm:$0xff]
    %v18 = vld [vmem:[%s0 + $0x10] sm:$0xff]
    %v19 = vld [vmem:[%s0 + $0x18] sm:$0xff]
    %v20 = vld [vmem:[%s0 + $0x20] sm:$0xff]
    %v21 = vld [vmem:[%s0 + $0x28] sm:$0xff]
    %v22 = vld [vmem:[%s0 + $0x30] sm:$0xff]
    %v23 = vpack.c.bf16 %v16, %v16
    %v24 = vpack.c.bf16 %v17, %v17
    %v25 = vpack.c.bf16 %v18, %v18
    %v26 = vpack.c.bf16 %v19, %v19
    %v27 = vpack.c.bf16 %v20, %v20
    %v28 = vpack.c.bf16 %v21, %v21
    %v29 = vpack.c.bf16 %v22, %v22
    %v30 = vld [vmem:[%s1] sm:$0xf]
    %v31 = vld [vmem:[%s1 + $0x4] sm:$0xf]
    %v32 = vld [vmem:[%s1 + $0x8] sm:$0xf]
    %v33 = vld [vmem:[%s1 + $0xc] sm:$0xf]
    %v34 = vld [vmem:[%s1 + $0x10] sm:$0xf]
    %v35 = vld [vmem:[%s1 + $0x14] sm:$0xf]
    %v36 = vld [vmem:[%s1 + $0x18] sm:$0xf]
    %v37 = vld [vmem:[%s1 + $0x1c] sm:$0xf]
    %v38 = vld [vmem:[%s1 + $0x20] sm:$0xf]
    %v39 = vld [vmem:[%s1 + $0x24] sm:$0xf]
    %v40 = vld [vmem:[%s1 + $0x28] sm:$0xf]
    %v41 = vld [vmem:[%s1 + $0x2c] sm:$0xf]
    %v42 = vld [vmem:[%s1 + $0x30] sm:$0xf]
    %v43 = vld [vmem:[%s1 + $0x34] sm:$0xf]
    %v44 = vld [vmem:[%s1 + $0x38] sm:$0xf]
    %v45 = vld [vmem:[%s1 + $0x3c] sm:$0xf]
    %v46 = vld [vmem:[%s1 + $0x40] sm:$0xf]
    %v47 = vld [vmem:[%s1 + $0x44] sm:$0xf]
    %v48 = vld [vmem:[%s1 + $0x48] sm:$0xf]
    %v49 = vld [vmem:[%s1 + $0x4c] sm:$0xf]
    %v50 = vld [vmem:[%s1 + $0x50] sm:$0xf]
    %v51 = vld [vmem:[%s1 + $0x54] sm:$0xf]
    %v52 = vld [vmem:[%s1 + $0x58] sm:$0xf]
    %v53 = vld [vmem:[%s1 + $0x5c] sm:$0xf]
    %v54 = vld [vmem:[%s1 + $0x60] sm:$0xf]
    %v55 = vld [vmem:[%s1 + $0x64] sm:$0xf]
    %v56 = vld [vmem:[%s1 + $0x68] sm:$0xf]
    %v57 = vld [vmem:[%s1 + $0x6c] sm:$0xf]
    %v58 = vld [vmem:[%s1 + $0x70] sm:$0xf]
    %v59 = vld [vmem:[%s1 + $0x74] sm:$0xf]
    %v60 = vld [vmem:[%s1 + $0x78] sm:$0xf]
    %v61 = vld [vmem:[%s1 + $0x7c] sm:$0xf]
    %v62 = vld [vmem:[%s1 + $0x80] sm:$0xf]
    %v63 = vld [vmem:[%s1 + $0x84] sm:$0xf]
    %v64 = vld [vmem:[%s1 + $0x88] sm:$0xf]
    %v65 = vld [vmem:[%s1 + $0x8c] sm:$0xf]
    %v66 = vld [vmem:[%s1 + $0x90] sm:$0xf]
    %v67 = vld [vmem:[%s1 + $0x94] sm:$0xf]
    %v68 = vld [vmem:[%s1 + $0x98] sm:$0xf]
    %v69 = vld [vmem:[%s1 + $0x9c] sm:$0xf]
    %v70 = vld [vmem:[%s1 + $0xa0] sm:$0xf]
    %v71 = vld [vmem:[%s1 + $0xa4] sm:$0xf]
    %v72 = vld [vmem:[%s1 + $0xa8] sm:$0xf]
    %v73 = vld [vmem:[%s1 + $0xac] sm:$0xf]
    %v74 = vld [vmem:[%s1 + $0xb0] sm:$0xf]
    %v75 = vld [vmem:[%s1 + $0xb4] sm:$0xf]
    %v76 = vld [vmem:[%s1 + $0xb8] sm:$0xf]
    %v77 = vld [vmem:[%s1 + $0xbc] sm:$0xf]
    %v78 = vld [vmem:[%s1 + $0xc0] sm:$0xf]
    %v79 = vld [vmem:[%s1 + $0xc4] sm:$0xf]
    %v80 = vld [vmem:[%s1 + $0xc8] sm:$0xf]
    %v81 = vld [vmem:[%s1 + $0xcc] sm:$0xf]
    %v82 = vld [vmem:[%s1 + $0xd0] sm:$0xf]
    %v83 = vld [vmem:[%s1 + $0xd4] sm:$0xf]
    %v84 = vld [vmem:[%s1 + $0xd8] sm:$0xf]
    %v85 = vld [vmem:[%s1 + $0xdc] sm:$0xf]
    %v86 = vld [vmem:[%s1 + $0xe0] sm:$0xf]
    %v87 = vld [vmem:[%s1 + $0xe4] sm:$0xf]
    %v88 = vld [vmem:[%s1 + $0xe8] sm:$0xf]
    %v89 = vld [vmem:[%s1 + $0xec] sm:$0xf]
    %v90 = vld [vmem:[%s1 + $0xf0] sm:$0xf]
    %v91 = vld [vmem:[%s1 + $0xf4] sm:$0xf]
    %v92 = vld [vmem:[%s1 + $0xf8] sm:$0xf]
    %v93 = vld [vmem:[%s1 + $0xfc] sm:$0xf]
    %v94 = vld [vmem:[%s1 + $0x100] sm:$0xf]
    %v95 = vld [vmem:[%s1 + $0x104] sm:$0xf]
    %v96 = vld [vmem:[%s1 + $0x108] sm:$0xf]
    %v97 = vld [vmem:[%s1 + $0x10c] sm:$0xf]
    %v98 = vld [vmem:[%s1 + $0x110] sm:$0xf]
    %v99 = vld [vmem:[%s1 + $0x114] sm:$0xf]
    %v100 = vld [vmem:[%s1 + $0x118] sm:$0xf]
    %v101 = vld [vmem:[%s1 + $0x11c] sm:$0xf]
    %v102 = vld [vmem:[%s1 + $0x120] sm:$0xf]
    %v103 = vld [vmem:[%s1 + $0x124] sm:$0xf]
    %v104 = vld [vmem:[%s1 + $0x128] sm:$0xf]
    %v105 = vld [vmem:[%s1 + $0x12c] sm:$0xf]
    %v106 = vld [vmem:[%s1 + $0x130] sm:$0xf]
    %v107 = vld [vmem:[%s1 + $0x134] sm:$0xf]
    %v108 = vld [vmem:[%s1 + $0x138] sm:$0xf]
    %v109 = vld [vmem:[%s1 + $0x13c] sm:$0xf]
    %v110 = vld [vmem:[%s1 + $0x140] sm:$0xf]
    %v111 = vld [vmem:[%s1 + $0x144] sm:$0xf]
    %v112 = vld [vmem:[%s1 + $0x148] sm:$0xf]
    %v113 = vld [vmem:[%s1 + $0x14c] sm:$0xf]
    %v114 = vld [vmem:[%s1 + $0x150] sm:$0xf]
    %v115 = vld [vmem:[%s1 + $0x154] sm:$0xf]
    %v116 = vld [vmem:[%s1 + $0x158] sm:$0xf]
    %v117 = vld [vmem:[%s1 + $0x15c] sm:$0xf]
    %v118 = vld [vmem:[%s1 + $0x160] sm:$0xf]
    %v119 = vld [vmem:[%s1 + $0x164] sm:$0xf]
    %v120 = vld [vmem:[%s1 + $0x168] sm:$0xf]
    %v121 = vld [vmem:[%s1 + $0x16c] sm:$0xf]
    %v122 = vld [vmem:[%s1 + $0x170] sm:$0xf]
    %v123 = vld [vmem:[%s1 + $0x174] sm:$0xf]
    %v124 = vld [vmem:[%s1 + $0x178] sm:$0xf]
    %v125 = vld [vmem:[%s1 + $0x17c] sm:$0xf]
    %v126 = vld [vmem:[%s1 + $0x180] sm:$0xf]
    %v127 = vld [vmem:[%s1 + $0x184] sm:$0xf]
    %v128 = vld [vmem:[%s2] sm:$0x1]
    %v130 = vlaneseq
    %v131 = vshrl.u32 %v130, 7
    %v132 = vsub.s32 0, %v131
    %v133 = vrot.slane %v128, %v132
    %v233 = vunpack.c.l.b16 %v30
    %v234 = vunpack.c.l.b16 %v31
    %v235 = vunpack.c.l.b16 %v32
    %v236 = vunpack.c.l.b16 %v33
    %v237 = vunpack.c.l.b16 %v34
    %v238 = vunpack.c.l.b16 %v35
    %v239 = vunpack.c.l.b16 %v36
    %v240 = vunpack.c.l.b16 %v37
    %v241 = vunpack.c.l.b16 %v38
    %v242 = vunpack.c.l.b16 %v39
    %v243 = vunpack.c.l.b16 %v40
    %v244 = vunpack.c.l.b16 %v41
    %v245 = vunpack.c.l.b16 %v42
    %v246 = vunpack.c.l.b16 %v43
    %v247 = vunpack.c.l.b16 %v44
    %v248 = vunpack.c.l.b16 %v45
    %v249 = vunpack.c.l.b16 %v46
    %v250 = vunpack.c.l.b16 %v47
    %v251 = vunpack.c.l.b16 %v48
    %v252 = vunpack.c.l.b16 %v49
    %v253 = vunpack.c.l.b16 %v50
    %v254 = vunpack.c.l.b16 %v51
    %v255 = vunpack.c.l.b16 %v52
    %v256 = vunpack.c.l.b16 %v53
    %v257 = vunpack.c.l.b16 %v54
    %v258 = vunpack.c.l.b16 %v55
    %v259 = vunpack.c.l.b16 %v56
    %v260 = vunpack.c.l.b16 %v57
    %v261 = vunpack.c.l.b16 %v58
    %v262 = vunpack.c.l.b16 %v59
    %v263 = vunpack.c.l.b16 %v60
    %v264 = vunpack.c.l.b16 %v61
    %v265 = vunpack.c.l.b16 %v62
    %v266 = vunpack.c.l.b16 %v63
    %v267 = vunpack.c.l.b16 %v64
    %v268 = vunpack.c.l.b16 %v65
    %v269 = vunpack.c.l.b16 %v66
    %v270 = vunpack.c.l.b16 %v67
    %v271 = vunpack.c.l.b16 %v68
    %v272 = vunpack.c.l.b16 %v69
    %v273 = vunpack.c.l.b16 %v70
    %v274 = vunpack.c.l.b16 %v71
    %v275 = vunpack.c.l.b16 %v72
    %v276 = vunpack.c.l.b16 %v73
    %v277 = vunpack.c.l.b16 %v74
    %v278 = vunpack.c.l.b16 %v75
    %v279 = vunpack.c.l.b16 %v76
    %v280 = vunpack.c.l.b16 %v77
    %v281 = vunpack.c.l.b16 %v78
    %v282 = vunpack.c.l.b16 %v79
    %v283 = vunpack.c.l.b16 %v80
    %v284 = vunpack.c.l.b16 %v81
    %v285 = vunpack.c.l.b16 %v82
    %v286 = vunpack.c.l.b16 %v83
    %v287 = vunpack.c.l.b16 %v84
    %v288 = vunpack.c.l.b16 %v85
    %v289 = vunpack.c.l.b16 %v86
    %v290 = vunpack.c.l.b16 %v87
    %v291 = vunpack.c.l.b16 %v88
    %v292 = vunpack.c.l.b16 %v89
    %v293 = vunpack.c.l.b16 %v90
    %v294 = vunpack.c.l.b16 %v91
    %v295 = vunpack.c.l.b16 %v92
    %v296 = vunpack.c.l.b16 %v93
    %v297 = vunpack.c.l.b16 %v94
    %v298 = vunpack.c.l.b16 %v95
    %v299 = vunpack.c.l.b16 %v96
    %v300 = vunpack.c.l.b16 %v97
    %v301 = vunpack.c.l.b16 %v98
    %v302 = vunpack.c.l.b16 %v99
    %v303 = vunpack.c.l.b16 %v100
    %v304 = vunpack.c.l.b16 %v101
    %v305 = vunpack.c.l.b16 %v102
    %v306 = vunpack.c.l.b16 %v103
    %v307 = vunpack.c.l.b16 %v104
    %v308 = vunpack.c.l.b16 %v105
    %v309 = vunpack.c.l.b16 %v106
    %v310 = vunpack.c.l.b16 %v107
    %v311 = vunpack.c.l.b16 %v108
    %v312 = vunpack.c.l.b16 %v109
    %v313 = vunpack.c.l.b16 %v110
    %v314 = vunpack.c.l.b16 %v111
    %v315 = vunpack.c.l.b16 %v112
    %v316 = vunpack.c.l.b16 %v113
    %v317 = vunpack.c.l.b16 %v114
    %v318 = vunpack.c.l.b16 %v115
    %v319 = vunpack.c.l.b16 %v116
    %v320 = vunpack.c.l.b16 %v117
    %v321 = vunpack.c.l.b16 %v118
    %v322 = vunpack.c.l.b16 %v119
    %v323 = vunpack.c.l.b16 %v120
    %v324 = vunpack.c.l.b16 %v121
    %v325 = vunpack.c.l.b16 %v122
    %v326 = vunpack.c.l.b16 %v123
    %v327 = vunpack.c.l.b16 %v124
    %v328 = vunpack.c.l.b16 %v125
    %v329 = vunpack.c.l.b16 %v126
    %v330 = vunpack.c.l.b16 %v127
    %v331 = vpack.c.b16 %v234, %v233
    %v332 = vpack.c.b16 %v236, %v235
    %v333 = vpack.c.b16 %v238, %v237
    %v334 = vpack.c.b16 %v240, %v239
    %v335 = vpack.c.b16 %v242, %v241
    %v336 = vpack.c.b16 %v244, %v243
    %v337 = vpack.c.b16 %v246, %v245
    %v338 = vpack.c.b16 %v248, %v247
    %v339 = vpack.c.b16 %v250, %v249
    %v340 = vpack.c.b16 %v252, %v251
    %v341 = vpack.c.b16 %v254, %v253
    %v342 = vpack.c.b16 %v256, %v255
    %v343 = vpack.c.b16 %v258, %v257
    %v344 = vpack.c.b16 %v260, %v259
    %v345 = vpack.c.b16 %v262, %v261
    %v346 = vpack.c.b16 %v264, %v263
    %v347 = vpack.c.b16 %v266, %v265
    %v348 = vpack.c.b16 %v268, %v267
    %v349 = vpack.c.b16 %v270, %v269
    %v350 = vpack.c.b16 %v272, %v271
    %v351 = vpack.c.b16 %v274, %v273
    %v352 = vpack.c.b16 %v276, %v275
    %v353 = vpack.c.b16 %v278, %v277
    %v354 = vpack.c.b16 %v280, %v279
    %v355 = vpack.c.b16 %v282, %v281
    %v356 = vpack.c.b16 %v284, %v283
    %v357 = vpack.c.b16 %v286, %v285
    %v358 = vpack.c.b16 %v288, %v287
    %v359 = vpack.c.b16 %v290, %v289
    %v360 = vpack.c.b16 %v292, %v291
    %v361 = vpack.c.b16 %v294, %v293
    %v362 = vpack.c.b16 %v296, %v295
    %v363 = vpack.c.b16 %v298, %v297
    %v364 = vpack.c.b16 %v300, %v299
    %v365 = vpack.c.b16 %v302, %v301
    %v366 = vpack.c.b16 %v304, %v303
    %v367 = vpack.c.b16 %v306, %v305
    %v368 = vpack.c.b16 %v308, %v307
    %v369 = vpack.c.b16 %v310, %v309
    %v370 = vpack.c.b16 %v312, %v311
    %v371 = vpack.c.b16 %v314, %v313
    %v372 = vpack.c.b16 %v316, %v315
    %v373 = vpack.c.b16 %v318, %v317
    %v374 = vpack.c.b16 %v320, %v319
    %v375 = vpack.c.b16 %v322, %v321
    %v376 = vpack.c.b16 %v324, %v323
    %v377 = vpack.c.b16 %v326, %v325
    %v378 = vpack.c.b16 %v328, %v327
    %v379 = vpack.c.b16 %v330, %v329
    %vm429 = vcmask 130048
    %v431 = vsel %vm429, %v29, 0
    %433 = vmatprep.subr.bf16.mxu0 0
    %434 = vmatpush1.bf16.msra.mxu0 %v338
    %435 = vmatprep.subr.bf16.mxu0 0
    %436 = vmatpush1.bf16.msra.mxu0 %v337
    %437 = vmatprep.subr.bf16.mxu0 0
    %438 = vmatpush1.bf16.msra.mxu0 %v336
    %439 = vmatprep.subr.bf16.mxu0 0
    %440 = vmatpush1.bf16.msra.mxu0 %v335
    %441 = vmatprep.subr.bf16.mxu0 0
    %442 = vmatpush1.bf16.msra.mxu0 %v334
    %443 = vmatprep.subr.bf16.mxu0 0
    %444 = vmatpush1.bf16.msra.mxu0 %v333
    %445 = vmatprep.subr.bf16.mxu0 0
    %446 = vmatpush1.bf16.msra.mxu0 %v332
    %447 = vmatprep.subr.bf16.mxu0 0
    %448 = vmatpush1.bf16.msra.mxu0 %v331
    %449 = vmatprep.subr.bf16.mxu0 0
    %450 = vmatpush2.bf16.msra.mxu0 %v346
    %451 = vmatprep.subr.bf16.mxu0 0
    %452 = vmatpush2.bf16.msra.mxu0 %v345
    %453 = vmatprep.subr.bf16.mxu0 0
    %454 = vmatpush2.bf16.msra.mxu0 %v344
    %455 = vmatprep.subr.bf16.mxu0 0
    %456 = vmatpush2.bf16.msra.mxu0 %v343
    %457 = vmatprep.subr.bf16.mxu0 0
    %458 = vmatpush2.bf16.msra.mxu0 %v342
    %459 = vmatprep.subr.bf16.mxu0 0
    %460 = vmatpush2.bf16.msra.mxu0 %v341
    %461 = vmatprep.subr.bf16.mxu0 0
    %462 = vmatpush2.bf16.msra.mxu0 %v340
    %463 = vmatprep.subr.bf16.mxu0 0
    %464 = vmatpush2.bf16.msra.mxu0 %v339
    %465 = vmatprep.mubr.bf16.mxu0 %v24
    %466 = vmatmul.mubr.bf16.gmra.mxu0 %v23
    %v467 = vpop.f32.mrf.mxu0
    %v468 = vadd.f32 %v133, %v467
    %v469 = vpop.f32.mrf.mxu0
    %v470 = vpop.f32.mrf.mxu0
    %v471 = vpop.f32.mrf.mxu0
    %472 = vdwg.mxu0
    %473 = vmatprep.subr.bf16.mxu0 0
    %474 = vmatpush1.bf16.msra.mxu0 %v354
    %475 = vmatprep.subr.bf16.mxu0 0
    %476 = vmatpush1.bf16.msra.mxu0 %v353
    %477 = vmatprep.subr.bf16.mxu0 0
    %478 = vmatpush1.bf16.msra.mxu0 %v352
    %479 = vmatprep.subr.bf16.mxu0 0
    %480 = vmatpush1.bf16.msra.mxu0 %v351
    %481 = vmatprep.subr.bf16.mxu0 0
    %482 = vmatpush1.bf16.msra.mxu0 %v350
    %483 = vmatprep.subr.bf16.mxu0 0
    %484 = vmatpush1.bf16.msra.mxu0 %v349
    %485 = vmatprep.subr.bf16.mxu0 0
    %486 = vmatpush1.bf16.msra.mxu0 %v348
    %487 = vmatprep.subr.bf16.mxu0 0
    %488 = vmatpush1.bf16.msra.mxu0 %v347
    %489 = vmatprep.subr.bf16.mxu0 0
    %490 = vmatpush2.bf16.msra.mxu0 %v362
    %491 = vmatprep.subr.bf16.mxu0 0
    %492 = vmatpush2.bf16.msra.mxu0 %v361
    %493 = vmatprep.subr.bf16.mxu0 0
    %494 = vmatpush2.bf16.msra.mxu0 %v360
    %495 = vmatprep.subr.bf16.mxu0 0
    %496 = vmatpush2.bf16.msra.mxu0 %v359
    %497 = vmatprep.subr.bf16.mxu0 0
    %498 = vmatpush2.bf16.msra.mxu0 %v358
    %499 = vmatprep.subr.bf16.mxu0 0
    %500 = vmatpush2.bf16.msra.mxu0 %v357
    %501 = vmatprep.subr.bf16.mxu0 0
    %502 = vmatpush2.bf16.msra.mxu0 %v356
    %503 = vmatprep.subr.bf16.mxu0 0
    %504 = vmatpush2.bf16.msra.mxu0 %v355
    %505 = vmatprep.mubr.bf16.mxu0 %v26
    %506 = vmatmul.mubr.bf16.gmra.mxu0 %v25
    %v507 = vpop.f32.mrf.mxu0
    %v508 = vadd.f32 %v468, %v507
    %v509 = vpop.f32.mrf.mxu0
    %v510 = vpop.f32.mrf.mxu0
    %v511 = vpop.f32.mrf.mxu0
    %512 = vdwg.mxu0
    %513 = vmatprep.subr.bf16.mxu0 0
    %514 = vmatpush1.bf16.msra.mxu0 %v370
    %515 = vmatprep.subr.bf16.mxu0 0
    %516 = vmatpush1.bf16.msra.mxu0 %v369
    %517 = vmatprep.subr.bf16.mxu0 0
    %518 = vmatpush1.bf16.msra.mxu0 %v368
    %519 = vmatprep.subr.bf16.mxu0 0
    %520 = vmatpush1.bf16.msra.mxu0 %v367
    %521 = vmatprep.subr.bf16.mxu0 0
    %522 = vmatpush1.bf16.msra.mxu0 %v366
    %523 = vmatprep.subr.bf16.mxu0 0
    %524 = vmatpush1.bf16.msra.mxu0 %v365
    %525 = vmatprep.subr.bf16.mxu0 0
    %526 = vmatpush1.bf16.msra.mxu0 %v364
    %527 = vmatprep.subr.bf16.mxu0 0
    %528 = vmatpush1.bf16.msra.mxu0 %v363
    %529 = vmatprep.subr.bf16.mxu0 0
    %530 = vmatpush2.bf16.msra.mxu0 %v378
    %531 = vmatprep.subr.bf16.mxu0 0
    %532 = vmatpush2.bf16.msra.mxu0 %v377
    %533 = vmatprep.subr.bf16.mxu0 0
    %534 = vmatpush2.bf16.msra.mxu0 %v376
    %535 = vmatprep.subr.bf16.mxu0 0
    %536 = vmatpush2.bf16.msra.mxu0 %v375
    %537 = vmatprep.subr.bf16.mxu0 0
    %538 = vmatpush2.bf16.msra.mxu0 %v374
    %539 = vmatprep.subr.bf16.mxu0 0
    %540 = vmatpush2.bf16.msra.mxu0 %v373
    %541 = vmatprep.subr.bf16.mxu0 0
    %542 = vmatpush2.bf16.msra.mxu0 %v372
    %543 = vmatprep.subr.bf16.mxu0 0
    %544 = vmatpush2.bf16.msra.mxu0 %v371
    %545 = vmatprep.mubr.bf16.mxu0 %v28
    %546 = vmatmul.mubr.bf16.gmra.mxu0 %v27
    %v547 = vpop.f32.mrf.mxu0
    %v548 = vadd.f32 %v508, %v547
    %v549 = vpop.f32.mrf.mxu0
    %v550 = vpop.f32.mrf.mxu0
    %v551 = vpop.f32.mrf.mxu0
    %552 = vdwg.mxu0
    %553 = vmatprep.subr.bf16.mxu0 0
    %554 = vmatpush1.bf16.msra.mxu0 0
    %555 = vmatprep.subr.bf16.mxu0 0
    %556 = vmatpush1.bf16.msra.mxu0 0
    %557 = vmatprep.subr.bf16.mxu0 0
    %558 = vmatpush1.bf16.msra.mxu0 0
    %559 = vmatprep.subr.bf16.mxu0 0
    %560 = vmatpush1.bf16.msra.mxu0 0
    %561 = vmatprep.subr.bf16.mxu0 0
    %562 = vmatpush1.bf16.msra.mxu0 0
    %563 = vmatprep.subr.bf16.mxu0 0
    %564 = vmatpush1.bf16.msra.mxu0 0
    %565 = vmatprep.subr.bf16.mxu0 0
    %566 = vmatpush1.bf16.msra.mxu0 0
    %567 = vmatprep.subr.bf16.mxu0 0
    %568 = vmatpush1.bf16.msra.mxu0 %v379
    %569 = vmatprep.subr.bf16.mxu0 0
    %570 = vmatpush2.bf16.msra.mxu0 0
    %571 = vmatprep.subr.bf16.mxu0 0
    %572 = vmatpush2.bf16.msra.mxu0 0
    %573 = vmatprep.subr.bf16.mxu0 0
    %574 = vmatpush2.bf16.msra.mxu0 0
    %575 = vmatprep.subr.bf16.mxu0 0
    %576 = vmatpush2.bf16.msra.mxu0 0
    %577 = vmatprep.subr.bf16.mxu0 0
    %578 = vmatpush2.bf16.msra.mxu0 0
    %579 = vmatprep.subr.bf16.mxu0 0
    %580 = vmatpush2.bf16.msra.mxu0 0
    %581 = vmatprep.subr.bf16.mxu0 0
    %582 = vmatpush2.bf16.msra.mxu0 0
    %583 = vmatprep.subr.bf16.mxu0 0
    %584 = vmatpush2.bf16.msra.mxu0 0
    %585 = vmatprep.mubr.bf16.mxu0 0
    %586 = vmatmul.mubr.bf16.gmra.mxu0 %v431
    %v587 = vpop.f32.mrf.mxu0
    %v588 = vadd.f32 %v548, %v587
    %v589 = vpop.f32.mrf.mxu0
    %v590 = vpop.f32.mrf.mxu0
    %v591 = vpop.f32.mrf.mxu0
    %592 = vdwg.mxu0
    %vm593 = vcmask 80896
    %594 = vst.msk [vmem:[#allocation2] sm:$0xff] %vm593, %v588
    // Predicated region
    $region14: #{logistic_reg_forward.1} parent=1 // pred_check
      _
    $region15: #{logistic_reg_forward.1} parent=1 // pred_check_branch
      %596 = sbr.rel (0) target = $region17
    $region16: #{logistic_reg_forward.1} parent=1 // pred_region
      %s598 = ssub.s32 128, 128
      %599 = vsyncadd [#allocation3], %s598
      %s601 = sshll.u32 [#allocation2], 4
      %s602 = int_to_ptr.vmem [resolvable:$true] %s601
      %604 = dma.vmem_to_hbm [thread:$0]  %s602, 128, %s3, [#allocation3]
    $region17: #{logistic_reg_forward.1} parent=1 // pred_fallthru
      _
    // Predicated region
    $region18: #{logistic_reg_forward.1} parent=1 // pred_check
      _
    $region19: #{logistic_reg_forward.1} parent=1 // pred_check_branch
      %606 = sbr.rel (0) target = $region21
    $region20: #{logistic_reg_forward.1} parent=1 // pred_region
      %607 = dma.done [#allocation3], 128
    $region21: #{logistic_reg_forward.1} parent=1 // pred_fallthru
      _
    %608 = vsyncpa [#allocation3], 1

</llo_original>
